<compile_context>
chip_gen: v7x
topology: tpu7x:2x2x1
jax: 0.10.0
libtpu: 0.0.40
codegen_flags: <defaults>
</compile_context>

<pallas_src>
import functools

import jax
import jax.numpy as jnp
from jax import lax
from jax.experimental import pallas as pl
from jax.experimental.pallas import tpu as pltpu

LANE = 128
_VMEM_LIMIT = 48 * 1024 * 1024     # scoped VMEM cap; fits every TPU generation
_FUSED_BUDGET = 40 * 1024 * 1024   # 4*plane + 2*weights must fit here to fuse
# TODO(synk): thresholds/tile sizes could be chosen per-generation via
# pltpu.get_tpu_info() (v7x: smaller VMEM, faster HBM); conservative one-size
# constants are used here.


def _se_gate_col(pooled_col, w1_ref, w2_ref):
    """Column-oriented SE gate: sigmoid(W2 @ relu(W1 @ pooled)) -> (C, 1) f32.

    Weights stay in PyTorch (out, in) layout; the channel axis stays on the
    sublane dimension throughout, so broadcasting the gate over a (1, C, T)
    tile needs no lane<->sublane relayout.
    """
    w1 = w1_ref[...].astype(jnp.float32)                          # (Ch, C)
    w2 = w2_ref[...].astype(jnp.float32)                          # (C, Ch)
    h = lax.dot_general(w1, pooled_col, (((1,), (0,)), ((), ())),
                        preferred_element_type=jnp.float32)       # (Ch, 1)
    h = jnp.maximum(h, 0.0)
    y = lax.dot_general(w2, h, (((1,), (0,)), ((), ())),
                        preferred_element_type=jnp.float32)       # (C, 1)
    return jax.nn.sigmoid(y)


def _fused_kernel(x_ref, w1_ref, w2_ref, o_ref, *, inv_hw):
    """Single pass over one batch plane: pool -> gate MLP -> scale."""
    xv = x_ref[...]                                               # (1, C, HW)
    pooled = jnp.sum(xv, axis=-1, keepdims=True,
                     dtype=jnp.float32)[0] * jnp.float32(inv_hw)  # (C, 1)
    gate = _se_gate_col(pooled, w1_ref, w2_ref)                   # (C, 1)
    o_ref[...] = xv * gate[None].astype(o_ref.dtype)              # (1,C,HW)*(1,C,1)


def _pool_gate_kernel(x_ref, w1_ref, w2_ref, gate_ref, acc_ref, *,
                      hw, hw_tile, ragged, inv_hw):
    """Tiled global-average-pool (f32 accumulation in VMEM scratch) with the
    gate MLP fused into the final spatial step.

    x_ref:    (1, C, T)   input tile (original dtype)
    gate_ref: (1, C, 1)   gate output in x.dtype, written on the last step
    acc_ref:  (C, 1) f32  running per-channel sum (scratch)
    """
    s = pl.program_id(1)

    @pl.when(s == 0)
    def _():
        acc_ref[...] = jnp.zeros_like(acc_ref)

    xv = x_ref[...].astype(jnp.float32)                           # (1, C, T)
    if ragged:
        # Mask out-of-range lanes of the clipped last tile (undefined data).
        lane = lax.broadcasted_iota(jnp.int32, xv.shape, 2)
        xv = jnp.where(lane < hw - s * hw_tile, xv, 0.0)
    acc_ref[...] += jnp.sum(xv, axis=-1, keepdims=True)[0]        # (C, 1)

    @pl.when(s == pl.num_programs(1) - 1)
    def _():
        pooled = acc_ref[...] * jnp.float32(inv_hw)               # true mean
        gate_ref[...] = _se_gate_col(pooled, w1_ref,
                                     w2_ref)[None].astype(gate_ref.dtype)


def _scale_kernel(x_ref, y_ref, o_ref):
    """Pure streaming broadcast multiply in the input dtype."""
    o_ref[...] = x_ref[...] * y_ref[...]          # (1, C, T) * (1, C, 1)


def se_layer(x, w1, w2, *, block_bytes=6 * 1024 * 1024,
             fused_budget_bytes=_FUSED_BUDGET):
    """SELayer forward.

    x:  (B, C, H, W)  NCHW, like PyTorch
    w1: (C//r, C)     first Linear weight (PyTorch (out, in) layout, no bias)
    w2: (C, C//r)     second Linear weight (no bias)
    """
    b, c, h, w = x.shape
    hw = h * w
    itemsize = jnp.dtype(x.dtype).itemsize
    hidden = w1.shape[0]
    assert w1.shape == (hidden, c) and w2.shape == (c, hidden)

    x_flat = x.reshape(b, c, hw)                  # contiguous reshape, no copy
    plane_bytes = c * hw * itemsize
    x_bytes = b * plane_bytes
    w_bytes = (w1.size * jnp.dtype(w1.dtype).itemsize
               + w2.size * jnp.dtype(w2.dtype).itemsize)
    mlp_flops = 4 * b * c * hidden
    gate_bytes = b * c * itemsize

    # ---- fused single-pass path: x read once, written once --------------------
    if 4 * plane_bytes + 2 * w_bytes <= fused_budget_bytes:
        out_flat = pl.pallas_call(
            functools.partial(_fused_kernel, inv_hw=1.0 / hw),
            out_shape=jax.ShapeDtypeStruct((b, c, hw), x.dtype),
            grid=(b,),
            in_specs=[
                pl.BlockSpec((1, c, hw), lambda i: (i, 0, 0)),
                pl.BlockSpec((hidden, c), lambda i: (0, 0)),
                pl.BlockSpec((c, hidden), lambda i: (0, 0)),
            ],
            out_specs=pl.BlockSpec((1, c, hw), lambda i: (i, 0, 0)),
            compiler_params=pltpu.CompilerParams(
                dimension_semantics=("parallel",),
                vmem_limit_bytes=_VMEM_LIMIT),
            cost_estimate=pl.CostEstimate(
                flops=2 * b * c * hw + mlp_flops,
                transcendentals=b * c,
                bytes_accessed=2 * x_bytes + w_bytes),
        )(x_flat, w1, w2)
        return out_flat.reshape(b, c, h, w)

    # ---- two-pass path ---------------------------------------------------------
    # Lane-dense spatial tiles (multiple of 128, or the full spatial extent)
    # capped at ~block_bytes so the scale pass' double-buffered in+out (4 tiles)
    # stays comfortably under the VMEM limit on every generation.
    max_tile = max(LANE, (block_bytes // max(1, c * itemsize)) // LANE * LANE)
    hw_tile = hw if hw <= max_tile else max_tile
    n_sp = pl.cdiv(hw, hw_tile)
    ragged = (hw % hw_tile) != 0

    # pass 1: pool + gate MLP fused; gates emitted as (B, C, 1) in x.dtype.
    gates = pl.pallas_call(
        functools.partial(_pool_gate_kernel, hw=hw, hw_tile=hw_tile,
                          ragged=ragged, inv_hw=1.0 / hw),
        out_shape=jax.ShapeDtypeStruct((b, c, 1), x.dtype),
        grid=(b, n_sp),
        in_specs=[
            pl.BlockSpec((1, c, hw_tile), lambda i, s: (i, 0, s)),
            pl.BlockSpec((hidden, c), lambda i, s: (0, 0)),
            pl.BlockSpec((c, hidden), lambda i, s: (0, 0)),
        ],
        out_specs=pl.BlockSpec((1, c, 1), lambda i, s: (i, 0, 0)),
        scratch_shapes=[pltpu.VMEM((c, 1), jnp.float32)],
        compiler_params=pltpu.CompilerParams(
            dimension_semantics=("parallel", "arbitrary"),
            vmem_limit_bytes=_VMEM_LIMIT),
        cost_estimate=pl.CostEstimate(
            flops=b * c * hw + mlp_flops,
            transcendentals=b * c,
            bytes_accessed=x_bytes + w_bytes + gate_bytes),
    )(x_flat, w1, w2)

    # pass 2: streaming broadcast multiply; exact output shape, edge blocks are
    # partial writes (no padding, no trailing slice).
    out_flat = pl.pallas_call(
        _scale_kernel,
        out_shape=jax.ShapeDtypeStruct((b, c, hw), x.dtype),
        grid=(b, n_sp),
        in_specs=[
            pl.BlockSpec((1, c, hw_tile), lambda i, s: (i, 0, s)),
            pl.BlockSpec((1, c, 1), lambda i, s: (i, 0, 0)),
        ],
        out_specs=pl.BlockSpec((1, c, hw_tile), lambda i, s: (i, 0, s)),
        compiler_params=pltpu.CompilerParams(
            dimension_semantics=("parallel", "parallel"),
            vmem_limit_bytes=_VMEM_LIMIT),
        cost_estimate=pl.CostEstimate(
            flops=b * c * hw,
            transcendentals=0,
            bytes_accessed=2 * x_bytes + gate_bytes),
    )(x_flat, gates)

    return out_flat.reshape(b, c, h, w)


def reference_se(x, w1, w2):
    # pure-JAX reference for verification
    pooled = jnp.mean(x, axis=(2, 3))               # (B, C)
    hdn = jnp.maximum(pooled @ w1.T, 0.0)           # (B, C//r)
    y = jax.nn.sigmoid(hdn @ w2.T)                  # (B, C)
    return x * y[:, :, None, None]


if __name__ == "__main__":
    B, C, H, W = 2, 4, 16, 16
    reduction = 1
    hidden = C // reduction

    key = jax.random.PRNGKey(0)
    kx, k1, k2 = jax.random.split(key, 3)
    x = jax.random.normal(kx, (B, C, H, W), dtype=jnp.float32)
    # Linear weights (no bias), PyTorch (out, in) layout
    w1 = jax.random.normal(k1, (hidden, C), dtype=jnp.float32) * 0.1
    w2 = jax.random.normal(k2, (C, hidden), dtype=jnp.float32) * 0.1

    # 1) default dispatch -> fused single-pass path (plane fits VMEM)
    out = jax.block_until_ready(se_layer(x, w1, w2))
    ref = reference_se(x, w1, w2)
    assert out.shape == (B, C, H, W)
    assert jnp.allclose(out, ref, atol=1e-5, rtol=1e-5), "fused path mismatch"

    # 2) force the tiled two-pass path with a ragged spatial tail
    #    (hw = 200, hw_tile = 128 -> last tile masked in the pool kernel)
    x2 = jax.random.normal(kx, (B, C, 10, 20), dtype=jnp.float32)
    out2 = jax.block_until_ready(
        se_layer(x2, w1, w2, block_bytes=512, fused_budget_bytes=0))
    ref2 = reference_se(x2, w1, w2)
    assert out2.shape == (B, C, 10, 20)
    assert jnp.allclose(out2, ref2, atol=1e-5, rtol=1e-5), "tiled path mismatch"

    print("KERNEL_OK")
</pallas_src>

<mosaic_0001>
module attributes {stable_mosaic.version = 11 : i64} {
  func.func @_fused_kernel(%arg0: i32, %arg1: memref<1x4x256xf32, #tpu.memory_space<vmem>>, %arg2: memref<4x4xf32, #tpu.memory_space<vmem>>, %arg3: memref<4x4xf32, #tpu.memory_space<vmem>>, %arg4: memref<1x4x256xf32, #tpu.memory_space<vmem>>) attributes {dimension_semantics = [#tpu.dimension_semantics<parallel>], iteration_bounds = array<i64: 2>, scalar_prefetch = 0 : i64, scratch_operands = 0 : i64, tpu.core_type = #tpu.core_type<tc>, window_params = [{transform_indices = @transform_0, window_bounds = array<i64: 1, 4, 256>}, {pipeline_mode = #tpu.pipeline_mode<synchronous>, transform_indices = @transform_1, window_bounds = array<i64: 4, 4>}, {pipeline_mode = #tpu.pipeline_mode<synchronous>, transform_indices = @transform_2, window_bounds = array<i64: 4, 4>}, {transform_indices = @transform_3, window_bounds = array<i64: 1, 4, 256>}]} {
    %c0 = arith.constant 0 : index
    %c0_0 = arith.constant 0 : index
    %c0_1 = arith.constant 0 : index
    %0 = vector.load %arg1[%c0, %c0_0, %c0_1] : memref<1x4x256xf32, #tpu.memory_space<vmem>>, vector<1x4x256xf32>
    %cst = arith.constant dense<0.000000e+00> : vector<1x4xf32>
    %1 = vector.multi_reduction <add>, %0, %cst [2] : vector<1x4x256xf32> to vector<1x4xf32>
    %2 = vector.shape_cast %1 : vector<1x4xf32> to vector<1x4x1xf32>
    %3 = vector.shape_cast %2 : vector<1x4x1xf32> to vector<4x1xf32>
    %cst_2 = arith.constant 3.906250e-03 : f32
    %4 = vector.broadcast %cst_2 : f32 to vector<4x1xf32>
    %5 = arith.mulf %3, %4 : vector<4x1xf32>
    %c0_3 = arith.constant 0 : index
    %c0_4 = arith.constant 0 : index
    %6 = vector.load %arg2[%c0_3, %c0_4] : memref<4x4xf32, #tpu.memory_space<vmem>>, vector<4x4xf32>
    %c0_5 = arith.constant 0 : index
    %c0_6 = arith.constant 0 : index
    %7 = vector.load %arg3[%c0_5, %c0_6] : memref<4x4xf32, #tpu.memory_space<vmem>>, vector<4x4xf32>
    %cst_7 = arith.constant dense<0.000000e+00> : vector<4x1xf32>
    %8 = tpu.matmul %6, %5, %cst_7 {dimension_numbers = #tpu.dot_dimension_numbers<[1], [0], [0], [1], [0, 0, 1, 1], [], []>} : vector<4x4xf32>, vector<4x1xf32>, vector<4x1xf32> -> vector<4x1xf32>
    %cst_8 = arith.constant 0.000000e+00 : f32
    %9 = vector.broadcast %cst_8 : f32 to vector<4x1xf32>
    %10 = arith.maximumf %8, %9 : vector<4x1xf32>
    %cst_9 = arith.constant dense<0.000000e+00> : vector<4x1xf32>
    %11 = tpu.matmul %7, %10, %cst_9 {dimension_numbers = #tpu.dot_dimension_numbers<[1], [0], [0], [1], [0, 0, 1, 1], [], []>} : vector<4x4xf32>, vector<4x1xf32>, vector<4x1xf32> -> vector<4x1xf32>
    %12 = arith.negf %11 : vector<4x1xf32>
    %13 = math.exp %12 : vector<4x1xf32>
    %cst_10 = arith.constant 1.000000e+00 : f32
    %14 = vector.broadcast %cst_10 : f32 to vector<4x1xf32>
    %15 = arith.addf %14, %13 : vector<4x1xf32>
    %16 = arith.divf %14, %15 : vector<4x1xf32>
    %17 = vector.shape_cast %16 : vector<4x1xf32> to vector<1x4x1xf32>
    %18 = vector.broadcast %17 : vector<1x4x1xf32> to vector<1x4x256xf32>
    %19 = arith.mulf %0, %18 : vector<1x4x256xf32>
    %c0_11 = arith.constant 0 : index
    %c0_12 = arith.constant 0 : index
    %c0_13 = arith.constant 0 : index
    %20 = vector.load %arg4[%c0_11, %c0_12, %c0_13] : memref<1x4x256xf32, #tpu.memory_space<vmem>>, vector<1x4x256xf32>
    tpu.vector_store %arg4[%c0_11, %c0_12, %c0_13], %19 {strides = array<i32>} : memref<1x4x256xf32, #tpu.memory_space<vmem>>, vector<1x4x256xf32>,
    return
  }
  func.func @transform_0(%arg0: i32) -> (i32, i32, i32) {
    %c0_i32 = arith.constant 0 : i32
    %c0_i32_0 = arith.constant 0 : i32
    %c0_i32_1 = arith.constant 0 : i32
    return %arg0, %c0_i32, %c0_i32_0 : i32, i32, i32
  }
  func.func @transform_1(%arg0: i32) -> (i32, i32) {
    %c0_i32 = arith.constant 0 : i32
    %c0_i32_0 = arith.constant 0 : i32
    %c0_i32_1 = arith.constant 0 : i32
    return %c0_i32, %c0_i32_0 : i32, i32
  }
  func.func @transform_2(%arg0: i32) -> (i32, i32) {
    %c0_i32 = arith.constant 0 : i32
    %c0_i32_0 = arith.constant 0 : i32
    %c0_i32_1 = arith.constant 0 : i32
    return %c0_i32, %c0_i32_0 : i32, i32
  }
  func.func @transform_3(%arg0: i32) -> (i32, i32, i32) {
    %c0_i32 = arith.constant 0 : i32
    %c0_i32_0 = arith.constant 0 : i32
    %c0_i32_1 = arith.constant 0 : i32
    return %arg0, %c0_i32, %c0_i32_0 : i32, i32, i32
  }
}

</mosaic_0001>

<llo_original>
// kernel: tpu_custom_call.1
$region0: #{tpu_custom_call.1}
  #allocation0 [shape = 'u32[]', space=smem, size = 0x4, offset = 0x4, fixed_abs, tag = 'smem constant byte address 0x4 - core index']
  #allocation1 [shape = 'u32[144,128]{1,0:T(1,128)}', space=vmem, size = 0x12000, scoped, tag = 'internal scratch']
  %s0 = inlined_call_operand.hbm [shape: f32[2,4,256], index: 0, kind: input, shape index: {}]
  %s1 = inlined_call_operand.hbm [shape: f32[4,4], index: 1, kind: input, shape index: {}]
  %s2 = inlined_call_operand.vmem [shape: f32[4,4], index: 2, kind: input, shape index: {}]
  %s3 = inlined_call_operand.hbm [shape: f32[2,4,256], index: 3, kind: output, shape index: {}]
  %s4 = sld [smem:[#allocation0]]
  $region53: #{tpu_custom_call.1} parent=0
    _
  %s6 = ssub.s32 1, %s4
  %s7 = scalar_select 0, %s6, %s4
  $region1: #{tpu_custom_call.1} parent=0
    #allocation2 [shape = 'u8[8192]{0}', space=vmem, size = 0x2000, scoped, tag = 'input window, operand 0']
    #allocation3 [shape = 's32[2]{0}', space=sflag, size = 0x8, scoped, tag = 'scoped memory for tpu_custom_call.1']
    #allocation4 [shape = 's32[2]{0}', space=sflag, size = 0x8, scoped, tag = 'scoped memory for tpu_custom_call.1']
    #allocation5 [shape = 'u8[2048]{0}', space=vmem, size = 0x800, scoped, tag = 'input window, operand 1, single buffered']
    #allocation6 [shape = 's32[1]{0}', space=sflag, size = 0x4, scoped, tag = 'scoped memory for tpu_custom_call.1']
    #allocation7 [shape = 'u8[8192]{0}', space=vmem, size = 0x2000, scoped, tag = 'output window, operand 0']
    %8 = vsyncpa [#allocation3], 0
    %s9 = scalar_lea.sflag [#allocation3], 1
    %10 = vsyncpa %s9, 0
    %11 = vsyncpa [#allocation6], 0
    %12 = vsyncpa [#allocation4], 0
    %s13 = scalar_lea.sflag [#allocation4], 1
    %14 = vsyncpa %s13, 0
    loop: start=0, step=1, limit=4
    $region2: #{tpu_custom_call.1} parent=1 // loop_pre_header
      _
    $region3: #{tpu_custom_call.1} parent=1 // loop_header
      %s16 = sphi 0, %s20
      %p17 = scmp.ge.s32.totalorder %s16, 4
      %s26 = sphi 0, %s28
      %s29 = sphi 0, %s26
      %s30 = sphi 0, %s29
      %s46 = sphi 0, %s30
      %s50 = sphi 0, %s50
      %s52 = sphi 0, %s50
      %s53 = sphi 0, %s52
      %s67 = sphi 0, %s53
      %s71 = sphi 0, %s71
      %s73 = sphi 0, %s71
      %s74 = sphi 0, %s73
      %s88 = sphi 0, %s74
      %s94 = sphi 0, %s96
      %s97 = sphi 0, %s94
      %s98 = sphi 0, %s97
      %s114 = sphi 0, %s98
    $region4: #{tpu_custom_call.1} parent=1 // loop_header_branch
      %19 = sbr.rel (%p17) target = $region8
    $region5: #{tpu_custom_call.1} parent=1 // loop_body
      %s21 = ssub.s32 %s16, 1
      %s22 = ssub.s32 %s16, 2
      %s23 = sadd.s32 %s16, 1
      %s24 = ssub.s32 %s16, %s23
      %p25 = scmp.eq.s32.totalorder %s24, 0
      %s27 = sadd.s32 %s26, 1
      %s28 = scalar_select %p25, %s26, %s27
      %p31 = pneg %p25
      %p32 = scmp.eq.s32.totalorder %s16, 1
      %p33 = por %p31, %p32
      %p34 = scmp.ne.s32.totalorder %s26, %s29
      %p35 = scmp.eq.s32.totalorder %s16, 0
      %p36 = por %p34, %p35
      %p37 = scmp.ne.s32.totalorder %s26, %s29
      %p38 = scmp.eq.s32.totalorder %s21, 1
      %p39 = por %p37, %p38
      %p40 = scmp.ne.s32.totalorder %s29, %s30
      %p41 = scmp.eq.s32.totalorder %s21, 0
      %p42 = por %p40, %p41
      %p43 = scmp.ne.s32.totalorder %s29, %s30
      %p44 = scmp.eq.s32.totalorder %s22, 1
      %p45 = por %p43, %p44
      %p47 = scmp.ne.s32.totalorder %s30, %s46
      %p48 = scmp.eq.s32.totalorder %s22, 0
      %p49 = por %p47, %p48
      %s51 = sadd.s32 %s50, 1
      %p54 = scmp.eq.s32.totalorder %s16, 1
      %p55 = scmp.ne.s32.totalorder %s50, %s52
      %p56 = scmp.eq.s32.totalorder %s16, 0
      %p57 = por %p55, %p56
      %p58 = scmp.ne.s32.totalorder %s50, %s52
      %p59 = scmp.eq.s32.totalorder %s21, 1
      %p60 = por %p58, %p59
      %p61 = scmp.ne.s32.totalorder %s52, %s53
      %p62 = scmp.eq.s32.totalorder %s21, 0
      %p63 = por %p61, %p62
      %p64 = scmp.ne.s32.totalorder %s52, %s53
      %p65 = scmp.eq.s32.totalorder %s22, 1
      %p66 = por %p64, %p65
      %p68 = scmp.ne.s32.totalorder %s53, %s67
      %p69 = scmp.eq.s32.totalorder %s22, 0
      %p70 = por %p68, %p69
      %s72 = sadd.s32 %s71, 1
      %p75 = scmp.eq.s32.totalorder %s16, 1
      %p76 = scmp.ne.s32.totalorder %s71, %s73
      %p77 = scmp.eq.s32.totalorder %s16, 0
      %p78 = por %p76, %p77
      %p79 = scmp.ne.s32.totalorder %s71, %s73
      %p80 = scmp.eq.s32.totalorder %s21, 1
      %p81 = por %p79, %p80
      %p82 = scmp.ne.s32.totalorder %s73, %s74
      %p83 = scmp.eq.s32.totalorder %s21, 0
      %p84 = por %p82, %p83
      %p85 = scmp.ne.s32.totalorder %s73, %s74
      %p86 = scmp.eq.s32.totalorder %s22, 1
      %p87 = por %p85, %p86
      %p89 = scmp.ne.s32.totalorder %s74, %s88
      %p90 = scmp.eq.s32.totalorder %s22, 0
      %p91 = por %p89, %p90
      %s92 = ssub.s32 %s16, %s23
      %p93 = scmp.eq.s32.totalorder %s92, 0
      %s95 = sadd.s32 %s94, 1
      %s96 = scalar_select %p93, %s94, %s95
      %p99 = pneg %p93
      %p100 = scmp.eq.s32.totalorder %s16, 1
      %p101 = por %p99, %p100
      %p102 = scmp.ne.s32.totalorder %s94, %s97
      %p103 = scmp.eq.s32.totalorder %s16, 0
      %p104 = por %p102, %p103
      %p105 = scmp.ne.s32.totalorder %s94, %s97
      %p106 = scmp.eq.s32.totalorder %s21, 1
      %p107 = por %p105, %p106
      %p108 = scmp.ne.s32.totalorder %s97, %s98
      %p109 = scmp.eq.s32.totalorder %s21, 0
      %p110 = por %p108, %p109
      %p111 = scmp.ne.s32.totalorder %s97, %s98
      %p112 = scmp.eq.s32.totalorder %s22, 1
      %p113 = por %p111, %p112
      %p115 = scmp.ne.s32.totalorder %s98, %s114
      %p116 = scmp.eq.s32.totalorder %s22, 0
      %p117 = por %p115, %p116
      %p118 = scmp.le.s32.totalorder 1, %s16
      %p119 = scmp.lt.s32.totalorder %s16, 3
      %p120 = pnand %p118, %p119
      %p121 = pneg %p120
      // Predicated region
      $region9: #{tpu_custom_call.1} parent=5 // pred_check
        _
      $region10: #{tpu_custom_call.1} parent=5 // pred_check_branch
        %123 = sbr.rel (%p120) target = $region12
      $region11: #{tpu_custom_call.1} parent=5 // pred_region
        %s124 = ssub.s32 %s16, 1
        // Predicated region
        $region13: #{tpu_custom_call.1} parent=11 // pred_check
          %p125 = pneg %p63
        $region14: #{tpu_custom_call.1} parent=11 // pred_check_branch
          %127 = sbr.rel (%p125) target = $region16
        $region15: #{tpu_custom_call.1} parent=11 // pred_region
          %s129 = ssub.s32 64, 64
          %130 = vsyncadd [#allocation6], %s129
          %s132 = sshll.u32 [#allocation5], 4
          %s133 = int_to_ptr.vmem [resolvable:$true] %s132
          %135 = dma.hbm_to_vmem [thread:$0]  %s1, 64, %s133, [#allocation6]
        $region16: #{tpu_custom_call.1} parent=11 // pred_fallthru
          _
        // Predicated region
        $region17: #{tpu_custom_call.1} parent=11 // pred_check
          %p136 = pneg %p84
        $region18: #{tpu_custom_call.1} parent=11 // pred_check_branch
          %138 = sbr.rel (%p136) target = $region20
        $region19: #{tpu_custom_call.1} parent=11 // pred_region
          _
        $region20: #{tpu_custom_call.1} parent=11 // pred_fallthru
          _
      $region12: #{tpu_custom_call.1} parent=5 // pred_fallthru
        _
      %p139 = scmp.lt.s32.totalorder %s16, 2
      // Predicated region
      $region21: #{tpu_custom_call.1} parent=5 // pred_check
        %p140 = pneg %p139
      $region22: #{tpu_custom_call.1} parent=5 // pred_check_branch
        %142 = sbr.rel (%p140) target = $region24
      $region23: #{tpu_custom_call.1} parent=5 // pred_region
        // Predicated region
        $region25: #{tpu_custom_call.1} parent=23 // pred_check
          %p143 = pneg %p36
        $region26: #{tpu_custom_call.1} parent=23 // pred_check_branch
          %145 = sbr.rel (%p143) target = $region28
        $region27: #{tpu_custom_call.1} parent=23 // pred_region
          %s146 = sand.u32 %s26, 1
          %s147 = scalar_lea.sflag [#allocation3], %s146
          %s148 = sand.u32 %s26, 1
          %s149 = smul.addr %s148, 8
          %s150 = scalar_lea.vmem [#allocation2], %s149
          %s152 = ssub.s32 128, 128
          %153 = vsyncadd %s147, %s152
          %s154 = smul.addr %s16, 2
          %s155 = smul.addr %s154, 64
          %s156 = scalar_lea.hbm %s0, %s155
          %s158 = sshll.u32 %s150, 4
          %s159 = int_to_ptr.vmem [resolvable:$true] %s158
          %161 = dma.hbm_to_vmem [thread:$0]  %s156, 128, %s159, %s147
        $region28: #{tpu_custom_call.1} parent=23 // pred_fallthru
          _
      $region24: #{tpu_custom_call.1} parent=5 // pred_fallthru
        _
      %p162 = scmp.le.s32.totalorder 1, %s16
      %p163 = scmp.lt.s32.totalorder %s16, 3
      %p164 = pnand %p162, %p163
      %p165 = pneg %p164
      // Predicated region
      $region29: #{tpu_custom_call.1} parent=5 // pred_check
        _
      $region30: #{tpu_custom_call.1} parent=5 // pred_check_branch
        %167 = sbr.rel (%p164) target = $region32
      $region31: #{tpu_custom_call.1} parent=5 // pred_region
        %s168 = ssub.s32 %s16, 1
        %s169 = sand.u32 %s29, 1
        %s170 = scalar_lea.sflag [#allocation3], %s169
        %s171 = sand.u32 %s29, 1
        %s172 = smul.addr %s171, 8
        %s173 = scalar_lea.vmem [#allocation2], %s172
        // Predicated region
        $region33: #{tpu_custom_call.1} parent=31 // pred_check
          %p174 = pneg %p42
        $region34: #{tpu_custom_call.1} parent=31 // pred_check_branch
          %176 = sbr.rel (%p174) target = $region36
        $region35: #{tpu_custom_call.1} parent=31 // pred_region
          %177 = dma.done %s170, 128
        $region36: #{tpu_custom_call.1} parent=31 // pred_fallthru
          _
        // Predicated region
        $region37: #{tpu_custom_call.1} parent=31 // pred_check
          %p178 = pneg %p63
        $region38: #{tpu_custom_call.1} parent=31 // pred_check_branch
          %180 = sbr.rel (%p178) target = $region40
        $region39: #{tpu_custom_call.1} parent=31 // pred_region
          %181 = dma.done [#allocation6], 64
        $region40: #{tpu_custom_call.1} parent=31 // pred_fallthru
          _
        %s182 = sand.u32 %s29, 1
        %s183 = scalar_lea.sflag [#allocation3], %s182
        %s184 = sand.u32 %s29, 1
        %s185 = smul.addr %s184, 8
        %s186 = scalar_lea.vmem [#allocation2], %s185
        %p187 = pneg %p42
        %p188 = pneg %p39
        %p189 = pneg %p63
        %p190 = pneg %p60
        %p191 = pneg %p84
        %p192 = pneg %p81
        %p193 = pneg %p110
        %p194 = pneg %p107
        %s195 = sand.u32 %s97, 1
        %s196 = scalar_lea.sflag [#allocation4], %s195
        %s197 = sand.u32 %s97, 1
        %s198 = smul.addr %s197, 8
        %s199 = scalar_lea.vmem [#allocation7], %s198
        %v200 = vld [vmem:[%s173] sm:$0xff]
        %v202 = vcombine.high %v200, %v200
        %vm204 = vcmask 1043456
        %v205 = vsel %vm204, %v200, 0.0
        %v206 = vsel %vm204, %v202, 0.0
        %v207 = vadd.f32 %v205, %v206
        %208 = vadd.xlane.f32.xlu0 %v207
        %v209 = vpop.xlane.xlu0 %208
        %v210 = vmul.f32 %v209, 0.00390625
        %v211 = vld [vmem:[#allocation5] sm:$0xf]
        %v212 = vld [vmem:[%s2] sm:$0xf]
        %vm213 = vcmask 31744
        %v215 = vsel %vm213, %v211, 0
        %v218 = vsel %vm204, %v210, 0
        %220 = vmatprep.subr.mxu0 0.0
        %221 = vmatpush1.msra.mxu0 %v218
        %222 = vmatprep.subr.mxu0 0.0
        %223 = vmatpush1.msra.mxu0 0.0
        %224 = vmatprep.subr.mxu0 0.0
        %225 = vmatpush1.msra.mxu0 0.0
        %226 = vmatprep.subr.mxu0 0.0
        %227 = vmatpush1.msra.mxu0 0.0
        %228 = vmatprep.subr.mxu0 0.0
        %229 = vmatpush1.msra.mxu0 0.0
        %230 = vmatprep.subr.mxu0 0.0
        %231 = vmatpush1.msra.mxu0 0.0
        %232 = vmatprep.subr.mxu0 0.0
        %233 = vmatpush1.msra.mxu0 0.0
        %234 = vmatprep.subr.mxu0 0.0
        %235 = vmatpush1.msra.mxu0 0.0
        %236 = vmatprep.subr.mxu0 0.0
        %237 = vmatpush1.msra.mxu0 0.0
        %238 = vmatprep.subr.mxu0 0.0
        %239 = vmatpush1.msra.mxu0 0.0
        %240 = vmatprep.subr.mxu0 0.0
        %241 = vmatpush1.msra.mxu0 0.0
        %242 = vmatprep.subr.mxu0 0.0
        %243 = vmatpush1.msra.mxu0 0.0
        %244 = vmatprep.subr.mxu0 0.0
        %245 = vmatpush1.msra.mxu0 0.0
        %246 = vmatprep.subr.mxu0 0.0
        %247 = vmatpush1.msra.mxu0 0.0
        %248 = vmatprep.subr.mxu0 0.0
        %249 = vmatpush1.msra.mxu0 0.0
        %250 = vmatprep.subr.mxu0 0.0
        %251 = vmatpush1.msra.mxu0 0.0
        %252 = vmatprep.subr.mxu0 0.0
        %253 = vmatpush1.msra.mxu0 0.0
        %254 = vmatprep.subr.mxu0 0.0
        %255 = vmatpush1.msra.mxu0 0.0
        %256 = vmatprep.subr.mxu0 0.0
        %257 = vmatpush1.msra.mxu0 0.0
        %258 = vmatprep.subr.mxu0 0.0
        %259 = vmatpush1.msra.mxu0 0.0
        %260 = vmatprep.subr.mxu0 0.0
        %261 = vmatpush1.msra.mxu0 0.0
        %262 = vmatprep.subr.mxu0 0.0
        %263 = vmatpush1.msra.mxu0 0.0
        %264 = vmatprep.subr.mxu0 0.0
        %265 = vmatpush1.msra.mxu0 0.0
        %266 = vmatprep.subr.mxu0 0.0
        %267 = vmatpush1.msra.mxu0 0.0
        %268 = vmatprep.subr.mxu0 0.0
        %269 = vmatpush1.msra.mxu0 0.0
        %270 = vmatprep.subr.mxu0 0.0
        %271 = vmatpush1.msra.mxu0 0.0
        %272 = vmatprep.subr.mxu0 0.0
        %273 = vmatpush1.msra.mxu0 0.0
        %274 = vmatprep.subr.mxu0 0.0
        %275 = vmatpush1.msra.mxu0 0.0
        %276 = vmatprep.subr.mxu0 0.0
        %277 = vmatpush1.msra.mxu0 0.0
        %278 = vmatprep.subr.mxu0 0.0
        %279 = vmatpush1.msra.mxu0 0.0
        %280 = vmatprep.subr.mxu0 0.0
        %281 = vmatpush1.msra.mxu0 0.0
        %282 = vmatprep.subr.mxu0 0.0
        %283 = vmatpush1.msra.mxu0 0.0
        %284 = vmatprep.mubr.f32.mxu0 0.0
        %285 = vmatmul.mubr.f32.gmra.mrb[0].mxu0 %v215
        %v286 = vpop.f32.mrb[0].mxu0
        %v287 = vadd.f32 0.0, %v286
        %v288 = vpop.f32.mrb[0].mxu0
        %289 = vdwg.mxu0
        %v290 = vmax.f32 %v287, 0.0
        %v292 = vsel %vm213, %v212, 0
        %v295 = vsel %vm204, %v290, 0
        %297 = vmatprep.subr.mxu0 0.0
        %298 = vmatpush1.msra.mxu0 %v295
        %299 = vmatprep.subr.mxu0 0.0
        %300 = vmatpush1.msra.mxu0 0.0
        %301 = vmatprep.subr.mxu0 0.0
        %302 = vmatpush1.msra.mxu0 0.0
        %303 = vmatprep.subr.mxu0 0.0
        %304 = vmatpush1.msra.mxu0 0.0
        %305 = vmatprep.subr.mxu0 0.0
        %306 = vmatpush1.msra.mxu0 0.0
        %307 = vmatprep.subr.mxu0 0.0
        %308 = vmatpush1.msra.mxu0 0.0
        %309 = vmatprep.subr.mxu0 0.0
        %310 = vmatpush1.msra.mxu0 0.0
        %311 = vmatprep.subr.mxu0 0.0
        %312 = vmatpush1.msra.mxu0 0.0
        %313 = vmatprep.subr.mxu0 0.0
        %314 = vmatpush1.msra.mxu0 0.0
        %315 = vmatprep.subr.mxu0 0.0
        %316 = vmatpush1.msra.mxu0 0.0
        %317 = vmatprep.subr.mxu0 0.0
        %318 = vmatpush1.msra.mxu0 0.0
        %319 = vmatprep.subr.mxu0 0.0
        %320 = vmatpush1.msra.mxu0 0.0
        %321 = vmatprep.subr.mxu0 0.0
        %322 = vmatpush1.msra.mxu0 0.0
        %323 = vmatprep.subr.mxu0 0.0
        %324 = vmatpush1.msra.mxu0 0.0
        %325 = vmatprep.subr.mxu0 0.0
        %326 = vmatpush1.msra.mxu0 0.0
        %327 = vmatprep.subr.mxu0 0.0
        %328 = vmatpush1.msra.mxu0 0.0
        %329 = vmatprep.subr.mxu0 0.0
        %330 = vmatpush1.msra.mxu0 0.0
        %331 = vmatprep.subr.mxu0 0.0
        %332 = vmatpush1.msra.mxu0 0.0
        %333 = vmatprep.subr.mxu0 0.0
        %334 = vmatpush1.msra.mxu0 0.0
        %335 = vmatprep.subr.mxu0 0.0
        %336 = vmatpush1.msra.mxu0 0.0
        %337 = vmatprep.subr.mxu0 0.0
        %338 = vmatpush1.msra.mxu0 0.0
        %339 = vmatprep.subr.mxu0 0.0
        %340 = vmatpush1.msra.mxu0 0.0
        %341 = vmatprep.subr.mxu0 0.0
        %342 = vmatpush1.msra.mxu0 0.0
        %343 = vmatprep.subr.mxu0 0.0
        %344 = vmatpush1.msra.mxu0 0.0
        %345 = vmatprep.subr.mxu0 0.0
        %346 = vmatpush1.msra.mxu0 0.0
        %347 = vmatprep.subr.mxu0 0.0
        %348 = vmatpush1.msra.mxu0 0.0
        %349 = vmatprep.subr.mxu0 0.0
        %350 = vmatpush1.msra.mxu0 0.0
        %351 = vmatprep.subr.mxu0 0.0
        %352 = vmatpush1.msra.mxu0 0.0
        %353 = vmatprep.subr.mxu0 0.0
        %354 = vmatpush1.msra.mxu0 0.0
        %355 = vmatprep.subr.mxu0 0.0
        %356 = vmatpush1.msra.mxu0 0.0
        %357 = vmatprep.subr.mxu0 0.0
        %358 = vmatpush1.msra.mxu0 0.0
        %359 = vmatprep.subr.mxu0 0.0
        %360 = vmatpush1.msra.mxu0 0.0
        %361 = vmatprep.mubr.f32.mxu0 0.0
        %362 = vmatmul.mubr.f32.gmra.mrb[0].mxu0 %v292
        %v363 = vpop.f32.mrb[0].mxu0
        %v364 = vadd.f32 0.0, %v363
        %v365 = vpop.f32.mrb[0].mxu0
        %366 = vdwg.mxu0
        %v367 = vxor.u32 %v364, 2147483648
        %v368 = vmul.f32 %v367, 1.442695
        %v369 = vpow.pop %v368
        %v370 = vadd.f32 %v369, 1.0
        %v371 = vrcp.pop %v370
        %v372 = vmul.f32 1.0, %v371
        %374 = vset.pattern.permute.xlu0 0
        %375 = vperm.xlu0 %374, %v372
        %v376 = vpop.permute.xlu0 %375
        %v378 = vunpack.c.l.s4 839922192
        %v379 = vunpack.c.0.s8 %v378
        %v380 = vlaneseq
        %v381 = vshrl.u32 %v380, 7
        %v382 = vsub.s32 %v379, %v381
        %v383 = vrot.slane %v376, %v382
        %v385 = vmul.f32 %v200, %v383
        %386 = vst [vmem:[%s199] sm:$0xff] %v385
        %s387 = sand.u32 %s97, 1
        %s388 = scalar_lea.sflag [#allocation4], %s387
        %s389 = sand.u32 %s97, 1
        %s390 = smul.addr %s389, 8
        %s391 = scalar_lea.vmem [#allocation7], %s390
        // Predicated region
        $region41: #{tpu_custom_call.1} parent=31 // pred_check
          %p392 = pneg %p107
        $region42: #{tpu_custom_call.1} parent=31 // pred_check_branch
          %394 = sbr.rel (%p392) target = $region44
        $region43: #{tpu_custom_call.1} parent=31 // pred_region
          %s396 = ssub.s32 128, 128
          %397 = vsyncadd %s388, %s396
          %s398 = smul.addr %s21, 2
          %s399 = smul.addr %s398, 64
          %s400 = scalar_lea.hbm %s3, %s399
          %s402 = sshll.u32 %s391, 4
          %s403 = int_to_ptr.vmem [resolvable:$true] %s402
          %405 = dma.vmem_to_hbm [thread:$0]  %s403, 128, %s400, %s388
        $region44: #{tpu_custom_call.1} parent=31 // pred_fallthru
          _
      $region32: #{tpu_custom_call.1} parent=5 // pred_fallthru
        _
      %p406 = scmp.le.s32.totalorder 2, %s16
      // Predicated region
      $region45: #{tpu_custom_call.1} parent=5 // pred_check
        %p407 = pneg %p406
      $region46: #{tpu_custom_call.1} parent=5 // pred_check_branch
        %409 = sbr.rel (%p407) target = $region48
      $region47: #{tpu_custom_call.1} parent=5 // pred_region
        %s410 = ssub.s32 %s16, 2
        // Predicated region
        $region49: #{tpu_custom_call.1} parent=47 // pred_check
          %p411 = pneg %p113
        $region50: #{tpu_custom_call.1} parent=47 // pred_check_branch
          %413 = sbr.rel (%p411) target = $region52
        $region51: #{tpu_custom_call.1} parent=47 // pred_region
          %s414 = sand.u32 %s98, 1
          %s415 = scalar_lea.sflag [#allocation4], %s414
          %s416 = sand.u32 %s98, 1
          %s417 = smul.addr %s416, 8
          %s418 = scalar_lea.vmem [#allocation7], %s417
          %419 = dma.done %s415, 128
        $region52: #{tpu_custom_call.1} parent=47 // pred_fallthru
          _
      $region48: #{tpu_custom_call.1} parent=5 // pred_fallthru
        _
    $region6: #{tpu_custom_call.1} parent=1 // loop_footer
      %s20 = sadd.s32 1, %s16
    $region7: #{tpu_custom_call.1} parent=1 // loop_footer_branch
      %15 = sbr.rel target = $region3
    $region8: #{tpu_custom_call.1} parent=1 // loop_exit
      _
    %420 = vsyncpa [#allocation3], 1
    %s421 = scalar_lea.sflag [#allocation3], 1
    %422 = vsyncpa %s421, 1
    %423 = vsyncpa [#allocation6], 1
    %424 = vsyncpa [#allocation4], 1
    %s425 = scalar_lea.sflag [#allocation4], 1
    %426 = vsyncpa %s425, 1

</llo_original>
